<compile_context>
chip_gen: v7x
topology: tpu7x:2x2x1
jax: 0.10.0
libtpu: 0.0.40
codegen_flags: <defaults>
</compile_context>

<pallas_src>
import functools

import jax
import jax.numpy as jnp
from jax.experimental import pallas as pl
from jax.experimental.pallas import tpu as pltpu

LANE = 128
MIN_GRID_STEPS = 8  # >= ~4 pipelined steps per TensorCore on dual-TC chips.


def _vmem_budgets():
    """Return (working_set_budget_bytes, vmem_limit_bytes) for this chip."""
    try:
        kind = jax.devices()[0].device_kind.lower()
    except Exception:  # pragma: no cover - defensive
        kind = ""
    if "v2" in kind or "v3" in kind:
        # Tiny VMEM generations: stay under the 16 MiB scoped default.
        return 8 * 1024 * 1024, 14 * 1024 * 1024
    if any(v in kind for v in ("v4", "v5", "v6")):
        # 128 MiB physical VMEM: big blocks, raised scoped limit.
        return 80 * 1024 * 1024, 96 * 1024 * 1024
    # v7x (64 MiB physical VMEM) / unknown: conservative budget.
    return 36 * 1024 * 1024, 48 * 1024 * 1024


def _layernorm2d_kernel(x_ref, w_ref, b_ref, o_ref, *, eps, inv_c):
    # x_ref block: (Bn, C, T) -- channels on sublanes, spatial columns on lanes.
    # w_ref/b_ref: (1, C, 1)  -- per-channel affine params (already f32).
    #
    # Two reads of x_ref (instead of one long-lived f32 bind) keep only the
    # centered values `xc` alive as a full-tile f32 temporary; the first
    # upcast fuses into the reduction. Two-pass (centered) variance matches
    # the PyTorch reference numerically.
    mean = jnp.sum(x_ref[...].astype(jnp.float32), axis=1, keepdims=True) * inv_c
    xc = x_ref[...].astype(jnp.float32) - mean                   # (Bn, C, T) f32
    var = jnp.sum(xc * xc, axis=1, keepdims=True) * inv_c        # biased var
    inv_std = jax.lax.rsqrt(var + eps)                           # EUP
    o_ref[...] = (w_ref[...] * (xc * inv_std) + b_ref[...]).astype(o_ref.dtype)


def layer_norm_2d(x, weight, bias, eps=1e-6):
    """x: (N, C, H, W). weight/bias: (C,). Returns (N, C, H, W)."""
    N, C, H, W = x.shape
    HW = H * W
    x2 = x.reshape(N, C, HW)
    w2 = weight.astype(jnp.float32).reshape(1, C, 1)
    b2 = bias.astype(jnp.float32).reshape(1, C, 1)

    itemsize = x.dtype.itemsize
    # Per-element VMEM footprint of one grid step:
    #   2 double-buffered input copies + 2 output copies in the NATIVE dtype,
    #   plus ~2 full-tile f32 temporaries (conservative bound for the centered
    #   values / squares inside the kernel).
    bytes_per_elem = 4 * itemsize + 2 * 4
    vmem_budget, vmem_limit = _vmem_budgets()
    cap_elems = max(C * LANE, vmem_budget // bytes_per_elem)

    total_elems = N * C * HW
    # Cap the block so the grid keeps >= MIN_GRID_STEPS steps when the data
    # allows it: pipeline overlap + work for both TensorCores on dual-TC chips
    # (including the N == 1 case).
    steps_cap = max(C * LANE, total_elems // MIN_GRID_STEPS)
    max_block_elems = max(C * LANE, min(cap_elems, steps_cap))

    # ---- spatial tiling (lane axis) ----
    if HW <= LANE:
        # TODO(synk): for HW < 128 a channel-on-lanes layout ((N, HW, C) view)
        # would keep stores unmasked; masked stores are accepted here since
        # such layers are tiny in absolute terms.
        T = HW
    else:
        n_slabs = pl.cdiv(HW, LANE)
        max_slabs = max(1, max_block_elems // (C * LANE))
        spb = min(n_slabs, max_slabs)
        # Balanced cdiv tiling: even slab counts per block; the tail block is
        # masked when T does not divide HW (per-column stats never mix lanes,
        # and out-of-bounds stores in the tail block are dropped).
        spb = pl.cdiv(n_slabs, pl.cdiv(n_slabs, spb))
        T = spb * LANE
    grid_t = pl.cdiv(HW, T)

    # ---- batch tiling (amortize ~0.35us/step overhead on small feature maps) ----
    Bn = 1
    if grid_t == 1 and N > 1:
        max_bn = max(1, max_block_elems // (C * T))
        if max_bn > 1:
            target_steps = min(N, MIN_GRID_STEPS)
            grid_n_target = max(pl.cdiv(N, max_bn), target_steps)
            Bn = max(1, pl.cdiv(N, grid_n_target))
    grid_n = pl.cdiv(N, Bn)

    kernel = functools.partial(_layernorm2d_kernel, eps=float(eps), inv_c=1.0 / C)

    # Advisory only: tells XLA this is a correctly-sized memory-bound call.
    cost = pl.CostEstimate(
        flops=8 * total_elems,
        transcendentals=N * HW,
        bytes_accessed=2 * total_elems * itemsize + 2 * C * 4,
    )

    out = pl.pallas_call(
        kernel,
        out_shape=jax.ShapeDtypeStruct((N, C, HW), x.dtype),
        grid_spec=pltpu.PrefetchScalarGridSpec(
            num_scalar_prefetch=0,
            grid=(grid_n, grid_t),
            in_specs=[
                pl.BlockSpec((Bn, C, T), lambda n, t: (n, 0, t)),
                pl.BlockSpec((1, C, 1), lambda n, t: (0, 0, 0)),
                pl.BlockSpec((1, C, 1), lambda n, t: (0, 0, 0)),
            ],
            out_specs=pl.BlockSpec((Bn, C, T), lambda n, t: (n, 0, t)),
        ),
        compiler_params=pltpu.CompilerParams(
            dimension_semantics=("parallel", "parallel"),
            vmem_limit_bytes=vmem_limit,
        ),
        cost_estimate=cost,
    )(x2, w2, b2)

    return out.reshape(N, C, H, W)


if __name__ == "__main__":
    key = jax.random.PRNGKey(0)

    def reference(x, w, b, eps):
        xf = x.astype(jnp.float32)
        u = jnp.mean(xf, axis=1, keepdims=True)
        s = jnp.mean((xf - u) ** 2, axis=1, keepdims=True)
        y = (xf - u) / jnp.sqrt(s + eps)
        return (w.astype(jnp.float32)[None, :, None, None] * y
                + b.astype(jnp.float32)[None, :, None, None])

    def check(k, shape, dtype, tol):
        kx, kw, kb = jax.random.split(k, 3)
        n, c, h, w = shape
        x = (jax.random.normal(kx, shape, jnp.float32) + 0.5).astype(dtype)
        weight = jnp.ones((c,), jnp.float32) + 0.1 * jax.random.normal(kw, (c,), jnp.float32)
        bias = 0.1 * jax.random.normal(kb, (c,), jnp.float32)
        out = jax.block_until_ready(layer_norm_2d(x, weight, bias, eps=1e-6))
        ref = reference(x, weight, bias, 1e-6)
        assert out.shape == shape and out.dtype == dtype
        assert jnp.allclose(out.astype(jnp.float32), ref, atol=tol, rtol=tol), shape

    k1, k2, k3, k4 = jax.random.split(key, 4)
    check(k1, (2, 4, 16, 16), jnp.float32, 1e-5)    # HW multiple of 128
    check(k2, (2, 4, 9, 15), jnp.float32, 1e-5)     # ragged HW -> masked spatial tail block
    check(k3, (17, 4, 8, 8), jnp.float32, 1e-5)     # HW < 128, odd N -> masked batch tail block
    check(k4, (2, 4, 16, 16), jnp.bfloat16, 5e-2)   # sub-f32 dtype sizing path
    print("KERNEL_OK")
</pallas_src>

<mosaic_0001>
module attributes {stable_mosaic.version = 11 : i64} {
  func.func @_layernorm2d_kernel(%arg0: i32, %arg1: i32, %arg2: memref<1x4x128xf32, #tpu.memory_space<vmem>>, %arg3: memref<1x4x1xf32, #tpu.memory_space<vmem>>, %arg4: memref<1x4x1xf32, #tpu.memory_space<vmem>>, %arg5: memref<1x4x128xf32, #tpu.memory_space<vmem>>) attributes {dimension_semantics = [#tpu.dimension_semantics<parallel>, #tpu.dimension_semantics<parallel>], iteration_bounds = array<i64: 2, 2>, scalar_prefetch = 0 : i64, scratch_operands = 0 : i64, tpu.core_type = #tpu.core_type<tc>, window_params = [{transform_indices = @transform_0, window_bounds = array<i64: 1, 4, 128>}, {pipeline_mode = #tpu.pipeline_mode<synchronous>, transform_indices = @transform_1, window_bounds = array<i64: 1, 4, 1>}, {pipeline_mode = #tpu.pipeline_mode<synchronous>, transform_indices = @transform_2, window_bounds = array<i64: 1, 4, 1>}, {transform_indices = @transform_3, window_bounds = array<i64: 1, 4, 128>}]} {
    %c0 = arith.constant 0 : index
    %c0_0 = arith.constant 0 : index
    %c0_1 = arith.constant 0 : index
    %0 = vector.load %arg2[%c0, %c0_0, %c0_1] : memref<1x4x128xf32, #tpu.memory_space<vmem>>, vector<1x4x128xf32>
    %cst = arith.constant dense<0.000000e+00> : vector<1x128xf32>
    %1 = vector.multi_reduction <add>, %0, %cst [1] : vector<1x4x128xf32> to vector<1x128xf32>
    %2 = vector.shape_cast %1 : vector<1x128xf32> to vector<1x1x128xf32>
    %cst_2 = arith.constant 2.500000e-01 : f32
    %3 = vector.broadcast %cst_2 : f32 to vector<1x1x128xf32>
    %4 = arith.mulf %2, %3 : vector<1x1x128xf32>
    %c0_3 = arith.constant 0 : index
    %c0_4 = arith.constant 0 : index
    %c0_5 = arith.constant 0 : index
    %5 = vector.load %arg2[%c0_3, %c0_4, %c0_5] : memref<1x4x128xf32, #tpu.memory_space<vmem>>, vector<1x4x128xf32>
    %6 = vector.broadcast %4 : vector<1x1x128xf32> to vector<1x4x128xf32>
    %7 = arith.subf %5, %6 : vector<1x4x128xf32>
    %8 = arith.mulf %7, %7 : vector<1x4x128xf32>
    %cst_6 = arith.constant dense<0.000000e+00> : vector<1x128xf32>
    %9 = vector.multi_reduction <add>, %8, %cst_6 [1] : vector<1x4x128xf32> to vector<1x128xf32>
    %10 = vector.shape_cast %9 : vector<1x128xf32> to vector<1x1x128xf32>
    %cst_7 = arith.constant 2.500000e-01 : f32
    %11 = vector.broadcast %cst_7 : f32 to vector<1x1x128xf32>
    %12 = arith.mulf %10, %11 : vector<1x1x128xf32>
    %cst_8 = arith.constant 9.99999997E-7 : f32
    %13 = vector.broadcast %cst_8 : f32 to vector<1x1x128xf32>
    %14 = arith.addf %12, %13 : vector<1x1x128xf32>
    %15 = math.rsqrt %14 : vector<1x1x128xf32>
    %c0_9 = arith.constant 0 : index
    %c0_10 = arith.constant 0 : index
    %c0_11 = arith.constant 0 : index
    %16 = vector.load %arg3[%c0_9, %c0_10, %c0_11] : memref<1x4x1xf32, #tpu.memory_space<vmem>>, vector<1x4x1xf32>
    %17 = vector.broadcast %15 : vector<1x1x128xf32> to vector<1x4x128xf32>
    %18 = arith.mulf %7, %17 : vector<1x4x128xf32>
    %19 = vector.broadcast %16 : vector<1x4x1xf32> to vector<1x4x128xf32>
    %20 = arith.mulf %19, %18 : vector<1x4x128xf32>
    %c0_12 = arith.constant 0 : index
    %c0_13 = arith.constant 0 : index
    %c0_14 = arith.constant 0 : index
    %21 = vector.load %arg4[%c0_12, %c0_13, %c0_14] : memref<1x4x1xf32, #tpu.memory_space<vmem>>, vector<1x4x1xf32>
    %22 = vector.broadcast %21 : vector<1x4x1xf32> to vector<1x4x128xf32>
    %23 = arith.addf %20, %22 : vector<1x4x128xf32>
    %c0_15 = arith.constant 0 : index
    %c0_16 = arith.constant 0 : index
    %c0_17 = arith.constant 0 : index
    %24 = vector.load %arg5[%c0_15, %c0_16, %c0_17] : memref<1x4x128xf32, #tpu.memory_space<vmem>>, vector<1x4x128xf32>
    tpu.vector_store %arg5[%c0_15, %c0_16, %c0_17], %23 {strides = array<i32>} : memref<1x4x128xf32, #tpu.memory_space<vmem>>, vector<1x4x128xf32>,
    return
  }
  func.func @transform_0(%arg0: i32, %arg1: i32) -> (i32, i32, i32) {
    %c0_i32 = arith.constant 0 : i32
    %c0_i32_0 = arith.constant 0 : i32
    return %arg0, %c0_i32, %arg1 : i32, i32, i32
  }
  func.func @transform_1(%arg0: i32, %arg1: i32) -> (i32, i32, i32) {
    %c0_i32 = arith.constant 0 : i32
    %c0_i32_0 = arith.constant 0 : i32
    %c0_i32_1 = arith.constant 0 : i32
    %c0_i32_2 = arith.constant 0 : i32
    return %c0_i32, %c0_i32_0, %c0_i32_1 : i32, i32, i32
  }
  func.func @transform_2(%arg0: i32, %arg1: i32) -> (i32, i32, i32) {
    %c0_i32 = arith.constant 0 : i32
    %c0_i32_0 = arith.constant 0 : i32
    %c0_i32_1 = arith.constant 0 : i32
    %c0_i32_2 = arith.constant 0 : i32
    return %c0_i32, %c0_i32_0, %c0_i32_1 : i32, i32, i32
  }
  func.func @transform_3(%arg0: i32, %arg1: i32) -> (i32, i32, i32) {
    %c0_i32 = arith.constant 0 : i32
    %c0_i32_0 = arith.constant 0 : i32
    return %arg0, %c0_i32, %arg1 : i32, i32, i32
  }
}

</mosaic_0001>

<llo_original>
// kernel: tpu_custom_call.1
$region0: #{tpu_custom_call.1}
  #allocation0 [shape = 'u32[]', space=smem, size = 0x4, offset = 0x4, fixed_abs, tag = 'smem constant byte address 0x4 - core index']
  #allocation1 [shape = 'u32[144,128]{1,0:T(1,128)}', space=vmem, size = 0x12000, scoped, tag = 'internal scratch']
  %s0 = inlined_call_operand.hbm [shape: f32[2,4,256], index: 0, kind: input, shape index: {}]
  %s1 = inlined_call_operand.vmem [shape: f32[1,4,1], index: 1, kind: input, shape index: {}]
  %s2 = inlined_call_operand.vmem [shape: f32[1,4,1], index: 2, kind: input, shape index: {}]
  %s3 = inlined_call_operand.hbm [shape: f32[2,4,256], index: 3, kind: output, shape index: {}]
  %s4 = sld [smem:[#allocation0]]
  $region49: #{tpu_custom_call.1} parent=0
    _
  %s6 = ssub.s32 1, %s4
  %s7 = scalar_select 0, %s6, %s4
  $region1: #{tpu_custom_call.1} parent=0
    #allocation2 [shape = 'u8[4096]{0}', space=vmem, size = 0x1000, scoped, tag = 'input window, operand 0']
    #allocation3 [shape = 's32[2]{0}', space=sflag, size = 0x8, scoped, tag = 'scoped memory for tpu_custom_call.1']
    #allocation4 [shape = 's32[2]{0}', space=sflag, size = 0x8, scoped, tag = 'scoped memory for tpu_custom_call.1']
    #allocation5 [shape = 'u8[4096]{0}', space=vmem, size = 0x1000, scoped, tag = 'output window, operand 0']
    %8 = vsyncpa [#allocation3], 0
    %s9 = scalar_lea.sflag [#allocation3], 1
    %10 = vsyncpa %s9, 0
    %11 = vsyncpa [#allocation4], 0
    %s12 = scalar_lea.sflag [#allocation4], 1
    %13 = vsyncpa %s12, 0
    loop: start=0, step=1, limit=6
    $region2: #{tpu_custom_call.1} parent=1 // loop_pre_header
      _
    $region3: #{tpu_custom_call.1} parent=1 // loop_header
      %s15 = sphi 0, %s19
      %p16 = scmp.ge.s32.totalorder %s15, 6
      %s22 = sphi 0, %s34
      %s23 = sphi 0, %s30
      %s24 = sphi 0, %s22
      %s25 = sphi 0, %s23
      %s26 = sphi 0, %s24
      %s27 = sphi 0, %s25
      %s39 = sphi 0, %s41
      %s42 = sphi 0, %s39
      %s43 = sphi 0, %s42
      %s59 = sphi 0, %s43
      %s63 = sphi 0, %s63
      %s65 = sphi 0, %s63
      %s66 = sphi 0, %s65
      %s80 = sphi 0, %s66
      %s84 = sphi 0, %s84
      %s86 = sphi 0, %s84
      %s87 = sphi 0, %s86
      %s101 = sphi 0, %s87
      %s109 = sphi 0, %s111
      %s112 = sphi 0, %s109
      %s113 = sphi 0, %s112
      %s129 = sphi 0, %s113
    $region4: #{tpu_custom_call.1} parent=1 // loop_header_branch
      %18 = sbr.rel (%p16) target = $region8
    $region5: #{tpu_custom_call.1} parent=1 // loop_body
      %s20 = ssub.s32 %s15, 1
      %s21 = ssub.s32 %s15, 2
      %s28 = sadd.s32 1, %s23
      %p29 = scmp.ge.s32.totalorder %s28, 2
      %s30 = scalar_select %p29, 0, %s28
      %s31 = sadd.s32 1, %s22
      %s32 = scalar_select %p29, %s31, %s22
      %p33 = scmp.ge.s32.totalorder %s32, 2
      %s34 = scalar_select %p33, 0, %s32
      %s35 = ssub.s32 %s22, %s34
      %s36 = ssub.s32 %s23, %s30
      %s37 = sor.u32 %s35, %s36
      %p38 = scmp.eq.s32.totalorder %s37, 0
      %s40 = sadd.s32 %s39, 1
      %s41 = scalar_select %p38, %s39, %s40
      %p44 = pneg %p38
      %p45 = scmp.eq.s32.totalorder %s15, 3
      %p46 = por %p44, %p45
      %p47 = scmp.ne.s32.totalorder %s39, %s42
      %p48 = scmp.eq.s32.totalorder %s15, 0
      %p49 = por %p47, %p48
      %p50 = scmp.ne.s32.totalorder %s39, %s42
      %p51 = scmp.eq.s32.totalorder %s20, 3
      %p52 = por %p50, %p51
      %p53 = scmp.ne.s32.totalorder %s42, %s43
      %p54 = scmp.eq.s32.totalorder %s20, 0
      %p55 = por %p53, %p54
      %p56 = scmp.ne.s32.totalorder %s42, %s43
      %p57 = scmp.eq.s32.totalorder %s21, 3
      %p58 = por %p56, %p57
      %p60 = scmp.ne.s32.totalorder %s43, %s59
      %p61 = scmp.eq.s32.totalorder %s21, 0
      %p62 = por %p60, %p61
      %s64 = sadd.s32 %s63, 1
      %p67 = scmp.eq.s32.totalorder %s15, 3
      %p68 = scmp.ne.s32.totalorder %s63, %s65
      %p69 = scmp.eq.s32.totalorder %s15, 0
      %p70 = por %p68, %p69
      %p71 = scmp.ne.s32.totalorder %s63, %s65
      %p72 = scmp.eq.s32.totalorder %s20, 3
      %p73 = por %p71, %p72
      %p74 = scmp.ne.s32.totalorder %s65, %s66
      %p75 = scmp.eq.s32.totalorder %s20, 0
      %p76 = por %p74, %p75
      %p77 = scmp.ne.s32.totalorder %s65, %s66
      %p78 = scmp.eq.s32.totalorder %s21, 3
      %p79 = por %p77, %p78
      %p81 = scmp.ne.s32.totalorder %s66, %s80
      %p82 = scmp.eq.s32.totalorder %s21, 0
      %p83 = por %p81, %p82
      %s85 = sadd.s32 %s84, 1
      %p88 = scmp.eq.s32.totalorder %s15, 3
      %p89 = scmp.ne.s32.totalorder %s84, %s86
      %p90 = scmp.eq.s32.totalorder %s15, 0
      %p91 = por %p89, %p90
      %p92 = scmp.ne.s32.totalorder %s84, %s86
      %p93 = scmp.eq.s32.totalorder %s20, 3
      %p94 = por %p92, %p93
      %p95 = scmp.ne.s32.totalorder %s86, %s87
      %p96 = scmp.eq.s32.totalorder %s20, 0
      %p97 = por %p95, %p96
      %p98 = scmp.ne.s32.totalorder %s86, %s87
      %p99 = scmp.eq.s32.totalorder %s21, 3
      %p100 = por %p98, %p99
      %p102 = scmp.ne.s32.totalorder %s87, %s101
      %p103 = scmp.eq.s32.totalorder %s21, 0
      %p104 = por %p102, %p103
      %s105 = ssub.s32 %s22, %s34
      %s106 = ssub.s32 %s23, %s30
      %s107 = sor.u32 %s105, %s106
      %p108 = scmp.eq.s32.totalorder %s107, 0
      %s110 = sadd.s32 %s109, 1
      %s111 = scalar_select %p108, %s109, %s110
      %p114 = pneg %p108
      %p115 = scmp.eq.s32.totalorder %s15, 3
      %p116 = por %p114, %p115
      %p117 = scmp.ne.s32.totalorder %s109, %s112
      %p118 = scmp.eq.s32.totalorder %s15, 0
      %p119 = por %p117, %p118
      %p120 = scmp.ne.s32.totalorder %s109, %s112
      %p121 = scmp.eq.s32.totalorder %s20, 3
      %p122 = por %p120, %p121
      %p123 = scmp.ne.s32.totalorder %s112, %s113
      %p124 = scmp.eq.s32.totalorder %s20, 0
      %p125 = por %p123, %p124
      %p126 = scmp.ne.s32.totalorder %s112, %s113
      %p127 = scmp.eq.s32.totalorder %s21, 3
      %p128 = por %p126, %p127
      %p130 = scmp.ne.s32.totalorder %s113, %s129
      %p131 = scmp.eq.s32.totalorder %s21, 0
      %p132 = por %p130, %p131
      %p133 = scmp.le.s32.totalorder 1, %s15
      %p134 = scmp.lt.s32.totalorder %s15, 5
      %p135 = pnand %p133, %p134
      %p136 = pneg %p135
      // Predicated region
      $region9: #{tpu_custom_call.1} parent=5 // pred_check
        _
      $region10: #{tpu_custom_call.1} parent=5 // pred_check_branch
        %138 = sbr.rel (%p135) target = $region12
      $region11: #{tpu_custom_call.1} parent=5 // pred_region
        %s139 = ssub.s32 %s15, 1
        // Predicated region
        $region13: #{tpu_custom_call.1} parent=11 // pred_check
          %p140 = pneg %p76
        $region14: #{tpu_custom_call.1} parent=11 // pred_check_branch
          %142 = sbr.rel (%p140) target = $region16
        $region15: #{tpu_custom_call.1} parent=11 // pred_region
          _
        $region16: #{tpu_custom_call.1} parent=11 // pred_fallthru
          _
        // Predicated region
        $region17: #{tpu_custom_call.1} parent=11 // pred_check
          %p143 = pneg %p97
        $region18: #{tpu_custom_call.1} parent=11 // pred_check_branch
          %145 = sbr.rel (%p143) target = $region20
        $region19: #{tpu_custom_call.1} parent=11 // pred_region
          _
        $region20: #{tpu_custom_call.1} parent=11 // pred_fallthru
          _
      $region12: #{tpu_custom_call.1} parent=5 // pred_fallthru
        _
      %p146 = scmp.lt.s32.totalorder %s15, 4
      // Predicated region
      $region21: #{tpu_custom_call.1} parent=5 // pred_check
        %p147 = pneg %p146
      $region22: #{tpu_custom_call.1} parent=5 // pred_check_branch
        %149 = sbr.rel (%p147) target = $region24
      $region23: #{tpu_custom_call.1} parent=5 // pred_region
        // Predicated region
        $region25: #{tpu_custom_call.1} parent=23 // pred_check
          %p150 = pneg %p49
        $region26: #{tpu_custom_call.1} parent=23 // pred_check_branch
          %152 = sbr.rel (%p150) target = $region28
        $region27: #{tpu_custom_call.1} parent=23 // pred_region
          %s153 = sand.u32 %s39, 1
          %s154 = scalar_lea.sflag [#allocation3], %s153
          %s155 = sand.u32 %s39, 1
          %s156 = smul.addr %s155, 4
          %s157 = scalar_lea.vmem [#allocation2], %s156
          %s159 = ssub.s32 64, 64
          %160 = vsyncadd %s154, %s159
          %s161 = smul.addr %s22, 2
          %s162 = sadd.s32 %s23, %s161
          %s163 = smul.addr %s162, 64
          %s164 = scalar_lea.hbm %s0, %s163
          %s166 = sshll.u32 %s157, 4
          %s167 = int_to_ptr.vmem [resolvable:$true] %s166
          %169 = dma.hbm_to_vmem [thread:$0]  %s164, 64, %s167, %s154
        $region28: #{tpu_custom_call.1} parent=23 // pred_fallthru
          _
      $region24: #{tpu_custom_call.1} parent=5 // pred_fallthru
        _
      %p170 = scmp.le.s32.totalorder 1, %s15
      %p171 = scmp.lt.s32.totalorder %s15, 5
      %p172 = pnand %p170, %p171
      %p173 = pneg %p172
      // Predicated region
      $region29: #{tpu_custom_call.1} parent=5 // pred_check
        _
      $region30: #{tpu_custom_call.1} parent=5 // pred_check_branch
        %175 = sbr.rel (%p172) target = $region32
      $region31: #{tpu_custom_call.1} parent=5 // pred_region
        %s176 = ssub.s32 %s15, 1
        %s177 = sand.u32 %s42, 1
        %s178 = scalar_lea.sflag [#allocation3], %s177
        %s179 = sand.u32 %s42, 1
        %s180 = smul.addr %s179, 4
        %s181 = scalar_lea.vmem [#allocation2], %s180
        // Predicated region
        $region33: #{tpu_custom_call.1} parent=31 // pred_check
          %p182 = pneg %p55
        $region34: #{tpu_custom_call.1} parent=31 // pred_check_branch
          %184 = sbr.rel (%p182) target = $region36
        $region35: #{tpu_custom_call.1} parent=31 // pred_region
          %185 = dma.done %s178, 64
        $region36: #{tpu_custom_call.1} parent=31 // pred_fallthru
          _
        %s186 = sand.u32 %s42, 1
        %s187 = scalar_lea.sflag [#allocation3], %s186
        %s188 = sand.u32 %s42, 1
        %s189 = smul.addr %s188, 4
        %s190 = scalar_lea.vmem [#allocation2], %s189
        %p191 = pneg %p55
        %p192 = pneg %p52
        %p193 = pneg %p76
        %p194 = pneg %p73
        %p195 = pneg %p97
        %p196 = pneg %p94
        %p197 = pneg %p125
        %p198 = pneg %p122
        %s199 = sand.u32 %s112, 1
        %s200 = scalar_lea.sflag [#allocation4], %s199
        %s201 = sand.u32 %s112, 1
        %s202 = smul.addr %s201, 4
        %s203 = scalar_lea.vmem [#allocation5], %s202
        %v204 = vld [vmem:[%s181] sm:$0xf]
        %vm205 = vcmask 1043456
        %v206 = vsel %vm205, %v204, 0.0
        %v207 = vrot.slane %v206, 4
        %v208 = vadd.f32 %v206, %v207
        %v209 = vrot.slane %v208, 2
        %v210 = vadd.f32 %v208, %v209
        %v211 = vrot.slane %v210, 1
        %v212 = vadd.f32 %v210, %v211
        %v213 = vmul.f32 %v212, 0.25
        %v214 = vsub.f32 %v204, %v213
        %v215 = vmul.f32 %v214, %v214
        %v216 = vsel %vm205, %v215, 0.0
        %v217 = vrot.slane %v216, 4
        %v218 = vadd.f32 %v216, %v217
        %v219 = vrot.slane %v218, 2
        %v220 = vadd.f32 %v218, %v219
        %v221 = vrot.slane %v220, 1
        %v222 = vadd.f32 %v220, %v221
        %v223 = vmul.f32 %v222, 0.25
        %v224 = vadd.f32 %v223, 1e-06
        %v225 = vrsqrt.pop %v224
        %v226 = vld [vmem:[%s1] sm:$0xf]
        %v227 = vmul.f32 %v214, %v225
        %229 = vset.pattern.permute.xlu0 0
        %230 = vperm.xlu0 %229, %v226
        %v231 = vpop.permute.xlu0 %230
        %v233 = vmul.f32 %v231, %v227
        %v234 = vld [vmem:[%s2] sm:$0xf]
        %236 = vset.pattern.permute.xlu0 0
        %237 = vperm.xlu0 %236, %v234
        %v238 = vpop.permute.xlu0 %237
        %v240 = vadd.f32 %v233, %v238
        %241 = vst [vmem:[%s203] sm:$0xf] %v240
        %s242 = sand.u32 %s112, 1
        %s243 = scalar_lea.sflag [#allocation4], %s242
        %s244 = sand.u32 %s112, 1
        %s245 = smul.addr %s244, 4
        %s246 = scalar_lea.vmem [#allocation5], %s245
        // Predicated region
        $region37: #{tpu_custom_call.1} parent=31 // pred_check
          %p247 = pneg %p122
        $region38: #{tpu_custom_call.1} parent=31 // pred_check_branch
          %249 = sbr.rel (%p247) target = $region40
        $region39: #{tpu_custom_call.1} parent=31 // pred_region
          %s251 = ssub.s32 64, 64
          %252 = vsyncadd %s243, %s251
          %s253 = smul.addr %s24, 2
          %s254 = sadd.s32 %s25, %s253
          %s255 = smul.addr %s254, 64
          %s256 = scalar_lea.hbm %s3, %s255
          %s258 = sshll.u32 %s246, 4
          %s259 = int_to_ptr.vmem [resolvable:$true] %s258
          %261 = dma.vmem_to_hbm [thread:$0]  %s259, 64, %s256, %s243
        $region40: #{tpu_custom_call.1} parent=31 // pred_fallthru
          _
      $region32: #{tpu_custom_call.1} parent=5 // pred_fallthru
        _
      %p262 = scmp.le.s32.totalorder 2, %s15
      // Predicated region
      $region41: #{tpu_custom_call.1} parent=5 // pred_check
        %p263 = pneg %p262
      $region42: #{tpu_custom_call.1} parent=5 // pred_check_branch
        %265 = sbr.rel (%p263) target = $region44
      $region43: #{tpu_custom_call.1} parent=5 // pred_region
        %s266 = ssub.s32 %s15, 2
        // Predicated region
        $region45: #{tpu_custom_call.1} parent=43 // pred_check
          %p267 = pneg %p128
        $region46: #{tpu_custom_call.1} parent=43 // pred_check_branch
          %269 = sbr.rel (%p267) target = $region48
        $region47: #{tpu_custom_call.1} parent=43 // pred_region
          %s270 = sand.u32 %s113, 1
          %s271 = scalar_lea.sflag [#allocation4], %s270
          %s272 = sand.u32 %s113, 1
          %s273 = smul.addr %s272, 4
          %s274 = scalar_lea.vmem [#allocation5], %s273
          %275 = dma.done %s271, 64
        $region48: #{tpu_custom_call.1} parent=43 // pred_fallthru
          _
      $region44: #{tpu_custom_call.1} parent=5 // pred_fallthru
        _
    $region6: #{tpu_custom_call.1} parent=1 // loop_footer
      %s19 = sadd.s32 1, %s15
    $region7: #{tpu_custom_call.1} parent=1 // loop_footer_branch
      %14 = sbr.rel target = $region3
    $region8: #{tpu_custom_call.1} parent=1 // loop_exit
      _
    %276 = vsyncpa [#allocation3], 1
    %s277 = scalar_lea.sflag [#allocation3], 1
    %278 = vsyncpa %s277, 1
    %279 = vsyncpa [#allocation4], 1
    %s280 = scalar_lea.sflag [#allocation4], 1
    %281 = vsyncpa %s280, 1

</llo_original>
